<compile_context>
chip_gen: v7x
topology: tpu7x:2x2x1
jax: 0.10.0
libtpu: 0.0.40
codegen_flags: <defaults>
</compile_context>

<pallas_src>
from functools import partial

import numpy as np
import jax
import jax.numpy as jnp
from jax import lax
from jax.experimental import pallas as pl
from jax.experimental.pallas import tpu as pltpu

# --- VMEM budgeting (per-generation) ----------------------------------------
# v5e: default scoped VMEM is only 16 MiB -> must raise vmem_limit_bytes.
# v7x: only 64 MiB physical VMEM -> keep the requested limit <= ~48 MiB.
# v6e: 128 MiB, comfortable either way.
_VMEM_LIMIT_BYTES = 48 * 1024 * 1024
_CHUNK_BUDGET_BYTES = 26 * 1024 * 1024   # target per-grid-step working set


def _lane_pad(n: int) -> int:
    return -(-int(n) // 128) * 128


def _sublane_pad(n: int) -> int:
    return -(-int(n) // 8) * 8


# ---------------------------------------------------------------------------
# Interpolation-matrix construction: numpy at trace time (compile constants).
# ---------------------------------------------------------------------------
def _interp_matrix(out_size: int, in_size: int) -> np.ndarray:
    """Dense 1-D bilinear matrix, PyTorch align_corners=False semantics."""
    out_size, in_size = int(out_size), int(in_size)
    scale = in_size / out_size
    dst = np.arange(out_size, dtype=np.float64)
    src = np.maximum((dst + 0.5) * scale - 0.5, 0.0)   # half-pixel, clamp < 0
    x0f = np.floor(src)
    lam = (src - x0f).astype(np.float32)
    x0 = np.minimum(x0f.astype(np.int64), in_size - 1)
    x1 = np.minimum(x0 + 1, in_size - 1)
    w = np.zeros((out_size, in_size), np.float32)
    rows = np.arange(out_size)
    np.add.at(w, (rows, x0), 1.0 - lam)
    np.add.at(w, (rows, x1), lam)
    return w


# ---------------------------------------------------------------------------
# Trace-time planning: pass order + channel-chunk size from a VMEM budget.
# ---------------------------------------------------------------------------
def _plan(ctot, hi, wi, ho, wo, in_itemsize, out_itemsize):
    # Pass order: lane-padded MXU work per channel (prefers lane-dense results,
    # e.g. height-first keeps the first matmul Wi lanes wide when Wo is small).
    cost_wf = hi * wi * _lane_pad(wo) + ho * hi * _lane_pad(wo)
    cost_hf = ho * hi * _lane_pad(wi) + ho * wi * _lane_pad(wo)
    width_first = cost_wf <= cost_hf
    th, tw = (hi, wo) if width_first else (ho, wi)

    # Per-channel VMEM: double-buffered input + output blocks.
    per_chan = (2 * _sublane_pad(hi) * _lane_pad(wi) * in_itemsize
                + 2 * _sublane_pad(ho) * _lane_pad(wo) * out_itemsize)
    # Fixed overhead: resident weights (conservatively x2 buffers, f32) plus
    # one channel's live f32 intermediate and output values.
    fixed = (2 * _sublane_pad(ho) * _lane_pad(hi) * 4
             + 2 * _sublane_pad(wi) * _lane_pad(wo) * 4
             + _sublane_pad(th) * _lane_pad(tw) * 4
             + _sublane_pad(ho) * _lane_pad(wo) * 4)
    avail = max(_CHUNK_BUDGET_BYTES - fixed, per_chan)
    cmax = max(1, avail // per_chan)

    if cmax >= ctot:
        cblk = ctot
    else:
        cblk = 1
        for d in range(int(cmax), 0, -1):   # largest divisor -> no ragged blocks
            if ctot % d == 0:
                cblk = d
                break
    return width_first, int(cblk)


# ---------------------------------------------------------------------------
# Pallas kernel: one channel chunk per grid step, weights resident in VMEM.
# ---------------------------------------------------------------------------
def _resize_kernel(wh_ref, wwt_ref, x_ref, o_ref, *, width_first: bool):
    # wh_ref : (Ho, Hi)  row-interpolation matrix
    # wwt_ref: (Wi, Wo)  column-interpolation matrix (transposed)
    # x_ref  : (Cblk, Hi, Wi)  channel chunk (compute dtype)
    # o_ref  : (Cblk, Ho, Wo)  output chunk (image dtype)
    cblk = x_ref.shape[0]

    def body(c, carry):
        xc = x_ref[c]                                              # (Hi, Wi)
        if width_first:
            # width pass on the raw image (compute dtype), f32 accumulate
            t = jnp.dot(xc, wwt_ref[...],
                        preferred_element_type=jnp.float32)        # (Hi, Wo) f32
            # height pass on the f32 intermediate with the f32 weight
            o = jnp.dot(wh_ref[...], t,
                        preferred_element_type=jnp.float32)        # (Ho, Wo) f32
        else:
            t = jnp.dot(wh_ref[...], xc,
                        preferred_element_type=jnp.float32)        # (Ho, Wi) f32
            o = jnp.dot(t, wwt_ref[...],
                        preferred_element_type=jnp.float32)        # (Ho, Wo) f32
        o_ref[c] = o.astype(o_ref.dtype)
        return carry

    lax.fori_loop(0, cblk, body, 0)


def _bilinear_resize_chw(x, size, compute_dtype=None):
    """Resize a (Ctot, Hi, Wi) channel stack to (Ctot, Ho, Wo) via Pallas."""
    ctot, hi, wi = (int(s) for s in x.shape)
    ho, wo = int(size[0]), int(size[1])

    out_dtype = x.dtype
    if not jnp.issubdtype(out_dtype, jnp.floating):
        out_dtype = jnp.float32          # bilinear resize of int images -> float
    cdt = jnp.dtype(compute_dtype) if compute_dtype is not None else jnp.dtype(out_dtype)

    width_first, cblk = _plan(ctot, hi, wi, ho, wo,
                              jnp.dtype(cdt).itemsize,
                              jnp.dtype(out_dtype).itemsize)

    # Weights built in f32.  The weight multiplying the raw image is cast to
    # the compute dtype; the weight applied to the f32 intermediate stays f32.
    wh = jnp.asarray(_interp_matrix(ho, hi))        # (Ho, Hi)
    wwt = jnp.asarray(_interp_matrix(wo, wi).T)     # (Wi, Wo)
    if width_first:
        wwt = wwt.astype(cdt)
    else:
        wh = wh.astype(cdt)

    xc = x.astype(cdt)
    n_chunks = ctot // cblk

    kernel = partial(_resize_kernel, width_first=width_first)
    return pl.pallas_call(
        kernel,
        out_shape=jax.ShapeDtypeStruct((ctot, ho, wo), out_dtype),
        grid=(n_chunks,),
        in_specs=[
            pl.BlockSpec((ho, hi), lambda c: (0, 0)),          # Wh  (resident)
            pl.BlockSpec((wi, wo), lambda c: (0, 0)),          # WwT (resident)
            pl.BlockSpec((cblk, hi, wi), lambda c: (c, 0, 0)),  # image chunk
        ],
        out_specs=pl.BlockSpec((cblk, ho, wo), lambda c: (c, 0, 0)),
        compiler_params=pltpu.CompilerParams(
            dimension_semantics=("parallel",),        # megacore sharding on v7x
            vmem_limit_bytes=_VMEM_LIMIT_BYTES,       # v5e default is only 16 MiB
        ),
    )(wh, wwt, xc)


def _resize_nchw(x, size, compute_dtype=None):
    n, c, h, w = (int(s) for s in x.shape)
    flat = x.reshape(n * c, h, w)                 # leading-dim merge: no copy
    out = _bilinear_resize_chw(flat, size, compute_dtype)
    return out.reshape(n, c, int(size[0]), int(size[1]))


# ---------------------------------------------------------------------------
# Module wrapper (kornia ResizePreProcessor semantics).
# ---------------------------------------------------------------------------
class ResizePreProcessor:
    """JAX/Pallas port of kornia.contrib.object_detection.ResizePreProcessor."""

    def __init__(self, size, interpolation_mode: str = "bilinear",
                 compute_dtype=None):
        # TODO(synk): only 'bilinear' is implemented; nearest / bicubic / area /
        # nearest-exact are not translated.
        if interpolation_mode != "bilinear":
            raise NotImplementedError(
                "only 'bilinear' interpolation is implemented")
        self.size = (int(size[0]), int(size[1]))
        self.compute_dtype = compute_dtype   # e.g. jnp.bfloat16 MXU fast path

    def __call__(self, imgs):
        # Pre-batched (N, C, H, W) array: zero-copy fast path (no stack).
        if hasattr(imgs, "ndim") and getattr(imgs, "ndim", 0) == 4:
            n, _, h, w = (int(s) for s in imgs.shape)
            out = _resize_nchw(imgs, self.size, self.compute_dtype)
            return out, {"original_size": [(h, w)] * n}

        imgs = list(imgs)
        assert len(imgs) > 0, "need at least one image"
        c0 = int(imgs[0].shape[0])
        assert all(im.ndim == 3 and int(im.shape[0]) == c0 for im in imgs), \
            "all images must be CHW with the same channel count"
        original_sizes = [(int(im.shape[1]), int(im.shape[2])) for im in imgs]

        same_shape = len({tuple(int(s) for s in im.shape) for im in imgs}) == 1
        if same_shape:
            # One batched kernel call over N*C channel chunks.
            # TODO(synk): the stack is one HBM round trip; pass a pre-batched
            # (N,C,H,W) array to avoid it entirely.
            out = _resize_nchw(jnp.stack(imgs, axis=0), self.size,
                               self.compute_dtype)
        else:
            # TODO(synk): write each image into a preallocated output slice via
            # input_output_aliases instead of stacking the per-image results.
            out = jnp.stack(
                [_bilinear_resize_chw(im, self.size, self.compute_dtype)
                 for im in imgs], axis=0)
        return out, {"original_size": original_sizes}


# ---------------------------------------------------------------------------
# Pure-JAX reference with *PyTorch* bilinear semantics (gather-based, no
# antialiasing) -- independent code path from the matmul kernel.
# ---------------------------------------------------------------------------
def _torch_bilinear_reference(img, size):
    c, hi, wi = img.shape
    ho, wo = int(size[0]), int(size[1])
    imgf = img.astype(jnp.float32)

    def axis_coords(out_size, in_size):
        scale = in_size / out_size
        src = jnp.maximum(
            (jnp.arange(out_size, dtype=jnp.float32) + 0.5) * scale - 0.5, 0.0)
        i0 = jnp.minimum(jnp.floor(src).astype(jnp.int32), in_size - 1)
        i1 = jnp.minimum(i0 + 1, in_size - 1)
        lam = src - i0.astype(jnp.float32)
        return i0, i1, lam

    y0, y1, ly = axis_coords(ho, hi)
    x0, x1, lx = axis_coords(wo, wi)
    ly = ly[None, :, None]
    lx = lx[None, None, :]

    def gather(ys, xs):
        return imgf[:, ys[:, None], xs[None, :]]

    top = (1.0 - lx) * gather(y0, x0) + lx * gather(y0, x1)
    bot = (1.0 - lx) * gather(y1, x0) + lx * gather(y1, x1)
    return (1.0 - ly) * top + ly * bot


if __name__ == "__main__":
    key = jax.random.PRNGKey(0)
    k1, k2, k3, k4 = jax.random.split(key, 4)
    size = (16, 16)
    pre = ResizePreProcessor(size=size, interpolation_mode="bilinear")

    # --- Mixed original sizes (per-image kernel calls) ----------------------
    img0 = jax.random.normal(k1, (4, 12, 20), dtype=jnp.float32)
    img1 = jax.random.normal(k2, (4, 16, 16), dtype=jnp.float32)
    out, meta = pre([img0, img1])
    out = jax.block_until_ready(out)
    assert out.shape == (2, 4, 16, 16), out.shape
    assert meta["original_size"] == [(12, 20), (16, 16)]
    ref = jnp.stack([_torch_bilinear_reference(img0, size),
                     _torch_bilinear_reference(img1, size)])
    err = float(jnp.max(jnp.abs(out - ref)))
    assert err < 1e-2, f"mixed-size max abs err {err}"

    # --- Same-shape image list: single batched (N*C chunked) kernel call ----
    img2 = jax.random.normal(k3, (3, 24, 40), dtype=jnp.float32)
    img3 = jax.random.normal(k4, (3, 24, 40), dtype=jnp.float32)
    out_b, meta_b = pre([img2, img3])
    out_b = jax.block_until_ready(out_b)
    assert out_b.shape == (2, 3, 16, 16), out_b.shape
    assert meta_b["original_size"] == [(24, 40), (24, 40)]
    ref_b = jnp.stack([_torch_bilinear_reference(img2, size),
                       _torch_bilinear_reference(img3, size)])
    err_b = float(jnp.max(jnp.abs(out_b - ref_b)))
    assert err_b < 1e-2, f"same-shape max abs err {err_b}"

    # --- Pre-batched (N, C, H, W) zero-copy path -----------------------------
    batch = jnp.stack([img2, img3], axis=0)
    out_p, meta_p = pre(batch)
    out_p = jax.block_until_ready(out_p)
    assert out_p.shape == (2, 3, 16, 16), out_p.shape
    assert meta_p["original_size"] == [(24, 40), (24, 40)]
    err_p = float(jnp.max(jnp.abs(out_p - ref_b)))
    assert err_p < 1e-2, f"pre-batched max abs err {err_p}"

    # --- bf16 fast path (f32 accumulation, f32 intermediate / second weight) -
    pre_bf16 = ResizePreProcessor(size=size, compute_dtype=jnp.bfloat16)
    out_bf, _ = pre_bf16([img0, img1])
    out_bf = jax.block_until_ready(out_bf)
    err_bf = float(jnp.max(jnp.abs(out_bf.astype(jnp.float32) - ref)))
    assert err_bf < 0.1, f"bf16 max abs err {err_bf}"

    print("KERNEL_OK")
</pallas_src>

<mosaic_0001>
module attributes {stable_mosaic.version = 11 : i64} {
  func.func @_resize_kernel(%arg0: i32, %arg1: memref<16x12xf32, #tpu.memory_space<vmem>>, %arg2: memref<20x16xf32, #tpu.memory_space<vmem>>, %arg3: memref<4x12x20xf32, #tpu.memory_space<vmem>>, %arg4: memref<4x16x16xf32, #tpu.memory_space<vmem>>) attributes {dimension_semantics = [#tpu.dimension_semantics<parallel>], iteration_bounds = array<i64: 1>, scalar_prefetch = 0 : i64, scratch_operands = 0 : i64, tpu.core_type = #tpu.core_type<tc>, window_params = [{pipeline_mode = #tpu.pipeline_mode<synchronous>, transform_indices = @transform_0, window_bounds = array<i64: 16, 12>}, {pipeline_mode = #tpu.pipeline_mode<synchronous>, transform_indices = @transform_1, window_bounds = array<i64: 20, 16>}, {transform_indices = @transform_2, window_bounds = array<i64: 4, 12, 20>}, {transform_indices = @transform_3, window_bounds = array<i64: 4, 16, 16>}]} {
    %c0_i32 = arith.constant 0 : i32
    %c4_i32 = arith.constant 4 : i32
    %0 = arith.addi %c0_i32, %c4_i32 : i32
    %c1_i32 = arith.constant 1 : i32
    scf.for %arg5 = %c0_i32 to %0 step %c1_i32  : i32 {
      %1 = arith.index_cast %arg5 : i32 to index
      %c0 = arith.constant 0 : index
      %c0_1 = arith.constant 0 : index
      %2 = vector.load %arg3[%1, %c0, %c0_1] : memref<4x12x20xf32, #tpu.memory_space<vmem>>, vector<1x12x20xf32>
      %3 = vector.shape_cast %2 : vector<1x12x20xf32> to vector<12x20xf32>
      %c0_2 = arith.constant 0 : index
      %c0_3 = arith.constant 0 : index
      %4 = vector.load %arg2[%c0_2, %c0_3] : memref<20x16xf32, #tpu.memory_space<vmem>>, vector<20x16xf32>
      %cst = arith.constant dense<0.000000e+00> : vector<12x16xf32>
      %5 = tpu.matmul %3, %4, %cst {dimension_numbers = #tpu.dot_dimension_numbers<[1], [0], [0], [1], [0, 0, 1, 1], [], []>} : vector<12x20xf32>, vector<20x16xf32>, vector<12x16xf32> -> vector<12x16xf32>
      %c0_4 = arith.constant 0 : index
      %c0_5 = arith.constant 0 : index
      %6 = vector.load %arg1[%c0_4, %c0_5] : memref<16x12xf32, #tpu.memory_space<vmem>>, vector<16x12xf32>
      %cst_6 = arith.constant dense<0.000000e+00> : vector<16x16xf32>
      %7 = tpu.matmul %6, %5, %cst_6 {dimension_numbers = #tpu.dot_dimension_numbers<[1], [0], [0], [1], [0, 0, 1, 1], [], []>} : vector<16x12xf32>, vector<12x16xf32>, vector<16x16xf32> -> vector<16x16xf32>
      %8 = arith.index_cast %arg5 : i32 to index
      %c0_7 = arith.constant 0 : index
      %c0_8 = arith.constant 0 : index
      %9 = vector.load %arg4[%8, %c0_7, %c0_8] : memref<4x16x16xf32, #tpu.memory_space<vmem>>, vector<1x16x16xf32>
      %10 = vector.shape_cast %9 : vector<1x16x16xf32> to vector<16x16xf32>
      %11 = vector.shape_cast %7 : vector<16x16xf32> to vector<1x16x16xf32>
      tpu.vector_store %arg4[%8, %c0_7, %c0_8], %11 {strides = array<i32>} : memref<4x16x16xf32, #tpu.memory_space<vmem>>, vector<1x16x16xf32>,
    }
    %c4_i32_0 = arith.constant 4 : i32
    return
  }
  func.func @transform_0(%arg0: i32) -> (i32, i32) {
    %c0_i32 = arith.constant 0 : i32
    %c0_i32_0 = arith.constant 0 : i32
    %c0_i32_1 = arith.constant 0 : i32
    return %c0_i32, %c0_i32_0 : i32, i32
  }
  func.func @transform_1(%arg0: i32) -> (i32, i32) {
    %c0_i32 = arith.constant 0 : i32
    %c0_i32_0 = arith.constant 0 : i32
    %c0_i32_1 = arith.constant 0 : i32
    return %c0_i32, %c0_i32_0 : i32, i32
  }
  func.func @transform_2(%arg0: i32) -> (i32, i32, i32) {
    %c0_i32 = arith.constant 0 : i32
    %c0_i32_0 = arith.constant 0 : i32
    %c0_i32_1 = arith.constant 0 : i32
    return %arg0, %c0_i32, %c0_i32_0 : i32, i32, i32
  }
  func.func @transform_3(%arg0: i32) -> (i32, i32, i32) {
    %c0_i32 = arith.constant 0 : i32
    %c0_i32_0 = arith.constant 0 : i32
    %c0_i32_1 = arith.constant 0 : i32
    return %arg0, %c0_i32, %c0_i32_0 : i32, i32, i32
  }
}

</mosaic_0001>

<llo_original>
// kernel: tpu_custom_call.1
$region0: #{tpu_custom_call.1}
  #allocation0 [shape = 'u32[]', space=smem, size = 0x4, offset = 0x4, fixed_abs, tag = 'smem constant byte address 0x4 - core index']
  #allocation1 [shape = 'u32[144,128]{1,0:T(1,128)}', space=vmem, size = 0x12000, scoped, tag = 'internal scratch']
  %s0 = inlined_call_operand.vmem [shape: f32[16,12], index: 0, kind: input, shape index: {}]
  %s1 = inlined_call_operand.vmem [shape: f32[20,16], index: 1, kind: input, shape index: {}]
  %s2 = inlined_call_operand.vmem [shape: f32[4,12,20], index: 2, kind: input, shape index: {}]
  %s3 = inlined_call_operand.hbm [shape: f32[4,16,16], index: 3, kind: output, shape index: {}]
  %s4 = sld [smem:[#allocation0]]
  $region29: #{tpu_custom_call.1} parent=0
    _
  %s6 = ssub.s32 1, %s4
  %s7 = scalar_select 0, %s6, %s4
  $region1: #{tpu_custom_call.1} parent=0
    #allocation2 [shape = 'u8[32768]{0}', space=vmem, size = 0x8000, scoped, tag = 'output window, operand 0, single buffered']
    #allocation3 [shape = 's32[1]{0}', space=sflag, size = 0x4, scoped, tag = 'scoped memory for tpu_custom_call.1']
    %8 = vsyncpa [#allocation3], 0
    // Predicated region
    $region2: #{tpu_custom_call.1} parent=1 // pred_check
      _
    $region3: #{tpu_custom_call.1} parent=1 // pred_check_branch
      %10 = sbr.rel (0) target = $region5
    $region4: #{tpu_custom_call.1} parent=1 // pred_region
      _
    $region5: #{tpu_custom_call.1} parent=1 // pred_fallthru
      _
    // Predicated region
    $region6: #{tpu_custom_call.1} parent=1 // pred_check
      _
    $region7: #{tpu_custom_call.1} parent=1 // pred_check_branch
      %12 = sbr.rel (0) target = $region9
    $region8: #{tpu_custom_call.1} parent=1 // pred_region
      _
    $region9: #{tpu_custom_call.1} parent=1 // pred_fallthru
      _
    // Predicated region
    $region10: #{tpu_custom_call.1} parent=1 // pred_check
      _
    $region11: #{tpu_custom_call.1} parent=1 // pred_check_branch
      %14 = sbr.rel (0) target = $region13
    $region12: #{tpu_custom_call.1} parent=1 // pred_region
      _
    $region13: #{tpu_custom_call.1} parent=1 // pred_fallthru
      _
    loop: start=0, step=1, limit=4
    $region14: #{tpu_custom_call.1} parent=1 // loop_pre_header
      _
    $region15: #{tpu_custom_call.1} parent=1 // loop_header
      %s16 = sphi 0, %s20
      %p17 = scmp.ge.s32.totalorder %s16, 4
    $region16: #{tpu_custom_call.1} parent=1 // loop_header_branch
      %19 = sbr.rel (%p17) target = $region20
    $region17: #{tpu_custom_call.1} parent=1 // loop_body
      %s21 = smul.u32 %s16, 16
      %s22 = scalar_lea.vmem %s2, %s21
      %v23 = vld [vmem:[%s22] sm:$0xff]
      %v24 = vld [vmem:[%s22 + $0x8] sm:$0xf]
      %v25 = vld [vmem:[%s1] sm:$0xff]
      %v26 = vld [vmem:[%s1 + $0x8] sm:$0xff]
      %v27 = vld [vmem:[%s1 + $0x10] sm:$0xf]
      %vm28 = vcmask 162816
      %v30 = vsel %vm28, %v23, 0
      %v33 = vsel %vm28, %v24, 0
      %vm35 = vcmask 1043456
      %v37 = vsel %vm35, %v27, 0
      %39 = vmatprep.subr.mxu0 0.0
      %40 = vmatpush1.msra.mxu0 %v25
      %41 = vmatprep.subr.mxu0 0.0
      %42 = vmatpush1.msra.mxu0 %v26
      %43 = vmatprep.subr.mxu0 0.0
      %44 = vmatpush1.msra.mxu0 %v37
      %45 = vmatprep.subr.mxu0 0.0
      %46 = vmatpush1.msra.mxu0 0.0
      %47 = vmatprep.subr.mxu0 0.0
      %48 = vmatpush1.msra.mxu0 0.0
      %49 = vmatprep.subr.mxu0 0.0
      %50 = vmatpush1.msra.mxu0 0.0
      %51 = vmatprep.subr.mxu0 0.0
      %52 = vmatpush1.msra.mxu0 0.0
      %53 = vmatprep.subr.mxu0 0.0
      %54 = vmatpush1.msra.mxu0 0.0
      %55 = vmatprep.subr.mxu0 0.0
      %56 = vmatpush1.msra.mxu0 0.0
      %57 = vmatprep.subr.mxu0 0.0
      %58 = vmatpush1.msra.mxu0 0.0
      %59 = vmatprep.subr.mxu0 0.0
      %60 = vmatpush1.msra.mxu0 0.0
      %61 = vmatprep.subr.mxu0 0.0
      %62 = vmatpush1.msra.mxu0 0.0
      %63 = vmatprep.subr.mxu0 0.0
      %64 = vmatpush1.msra.mxu0 0.0
      %65 = vmatprep.subr.mxu0 0.0
      %66 = vmatpush1.msra.mxu0 0.0
      %67 = vmatprep.subr.mxu0 0.0
      %68 = vmatpush1.msra.mxu0 0.0
      %69 = vmatprep.subr.mxu0 0.0
      %70 = vmatpush1.msra.mxu0 0.0
      %71 = vmatprep.subr.mxu0 0.0
      %72 = vmatpush1.msra.mxu0 0.0
      %73 = vmatprep.subr.mxu0 0.0
      %74 = vmatpush1.msra.mxu0 0.0
      %75 = vmatprep.subr.mxu0 0.0
      %76 = vmatpush1.msra.mxu0 0.0
      %77 = vmatprep.subr.mxu0 0.0
      %78 = vmatpush1.msra.mxu0 0.0
      %79 = vmatprep.subr.mxu0 0.0
      %80 = vmatpush1.msra.mxu0 0.0
      %81 = vmatprep.subr.mxu0 0.0
      %82 = vmatpush1.msra.mxu0 0.0
      %83 = vmatprep.subr.mxu0 0.0
      %84 = vmatpush1.msra.mxu0 0.0
      %85 = vmatprep.subr.mxu0 0.0
      %86 = vmatpush1.msra.mxu0 0.0
      %87 = vmatprep.subr.mxu0 0.0
      %88 = vmatpush1.msra.mxu0 0.0
      %89 = vmatprep.subr.mxu0 0.0
      %90 = vmatpush1.msra.mxu0 0.0
      %91 = vmatprep.subr.mxu0 0.0
      %92 = vmatpush1.msra.mxu0 0.0
      %93 = vmatprep.subr.mxu0 0.0
      %94 = vmatpush1.msra.mxu0 0.0
      %95 = vmatprep.subr.mxu0 0.0
      %96 = vmatpush1.msra.mxu0 0.0
      %97 = vmatprep.subr.mxu0 0.0
      %98 = vmatpush1.msra.mxu0 0.0
      %99 = vmatprep.subr.mxu0 0.0
      %100 = vmatpush1.msra.mxu0 0.0
      %101 = vmatprep.subr.mxu0 0.0
      %102 = vmatpush1.msra.mxu0 0.0
      %103 = vmatprep.mubr.f32.mxu0 0.0
      %104 = vmatmul.mubr.f32.gmra.mrb[0].mxu0 %v30
      %v105 = vpop.f32.mrb[0].mxu0
      %v106 = vadd.f32 0.0, %v105
      %v107 = vpop.f32.mrb[0].mxu0
      %108 = vmatprep.mubr.f32.mxu0 0.0
      %109 = vmatmul.mubr.f32.gmra.mrb[0].mxu0 %v33
      %v110 = vpop.f32.mrb[0].mxu0
      %v111 = vadd.f32 0.0, %v110
      %v112 = vpop.f32.mrb[0].mxu0
      %113 = vdwg.mxu0
      %v114 = vld [vmem:[%s0] sm:$0xff]
      %v115 = vld [vmem:[%s0 + $0x8] sm:$0xff]
      %vm116 = vcmask 97280
      %v118 = vsel %vm116, %v114, 0
      %v121 = vsel %vm116, %v115, 0
      %v124 = vsel %vm35, %v111, 0
      %126 = vmatprep.subr.mxu0 0.0
      %127 = vmatpush1.msra.mxu0 %v106
      %128 = vmatprep.subr.mxu0 0.0
      %129 = vmatpush1.msra.mxu0 %v124
      %130 = vmatprep.subr.mxu0 0.0
      %131 = vmatpush1.msra.mxu0 0.0
      %132 = vmatprep.subr.mxu0 0.0
      %133 = vmatpush1.msra.mxu0 0.0
      %134 = vmatprep.subr.mxu0 0.0
      %135 = vmatpush1.msra.mxu0 0.0
      %136 = vmatprep.subr.mxu0 0.0
      %137 = vmatpush1.msra.mxu0 0.0
      %138 = vmatprep.subr.mxu0 0.0
      %139 = vmatpush1.msra.mxu0 0.0
      %140 = vmatprep.subr.mxu0 0.0
      %141 = vmatpush1.msra.mxu0 0.0
      %142 = vmatprep.subr.mxu0 0.0
      %143 = vmatpush1.msra.mxu0 0.0
      %144 = vmatprep.subr.mxu0 0.0
      %145 = vmatpush1.msra.mxu0 0.0
      %146 = vmatprep.subr.mxu0 0.0
      %147 = vmatpush1.msra.mxu0 0.0
      %148 = vmatprep.subr.mxu0 0.0
      %149 = vmatpush1.msra.mxu0 0.0
      %150 = vmatprep.subr.mxu0 0.0
      %151 = vmatpush1.msra.mxu0 0.0
      %152 = vmatprep.subr.mxu0 0.0
      %153 = vmatpush1.msra.mxu0 0.0
      %154 = vmatprep.subr.mxu0 0.0
      %155 = vmatpush1.msra.mxu0 0.0
      %156 = vmatprep.subr.mxu0 0.0
      %157 = vmatpush1.msra.mxu0 0.0
      %158 = vmatprep.subr.mxu0 0.0
      %159 = vmatpush1.msra.mxu0 0.0
      %160 = vmatprep.subr.mxu0 0.0
      %161 = vmatpush1.msra.mxu0 0.0
      %162 = vmatprep.subr.mxu0 0.0
      %163 = vmatpush1.msra.mxu0 0.0
      %164 = vmatprep.subr.mxu0 0.0
      %165 = vmatpush1.msra.mxu0 0.0
      %166 = vmatprep.subr.mxu0 0.0
      %167 = vmatpush1.msra.mxu0 0.0
      %168 = vmatprep.subr.mxu0 0.0
      %169 = vmatpush1.msra.mxu0 0.0
      %170 = vmatprep.subr.mxu0 0.0
      %171 = vmatpush1.msra.mxu0 0.0
      %172 = vmatprep.subr.mxu0 0.0
      %173 = vmatpush1.msra.mxu0 0.0
      %174 = vmatprep.subr.mxu0 0.0
      %175 = vmatpush1.msra.mxu0 0.0
      %176 = vmatprep.subr.mxu0 0.0
      %177 = vmatpush1.msra.mxu0 0.0
      %178 = vmatprep.subr.mxu0 0.0
      %179 = vmatpush1.msra.mxu0 0.0
      %180 = vmatprep.subr.mxu0 0.0
      %181 = vmatpush1.msra.mxu0 0.0
      %182 = vmatprep.subr.mxu0 0.0
      %183 = vmatpush1.msra.mxu0 0.0
      %184 = vmatprep.subr.mxu0 0.0
      %185 = vmatpush1.msra.mxu0 0.0
      %186 = vmatprep.subr.mxu0 0.0
      %187 = vmatpush1.msra.mxu0 0.0
      %188 = vmatprep.subr.mxu0 0.0
      %189 = vmatpush1.msra.mxu0 0.0
      %190 = vmatprep.mubr.f32.mxu0 0.0
      %191 = vmatmul.mubr.f32.gmra.mrb[0].mxu0 %v118
      %v192 = vpop.f32.mrb[0].mxu0
      %v193 = vadd.f32 0.0, %v192
      %v194 = vpop.f32.mrb[0].mxu0
      %195 = vmatprep.mubr.f32.mxu0 0.0
      %196 = vmatmul.mubr.f32.gmra.mrb[0].mxu0 %v121
      %v197 = vpop.f32.mrb[0].mxu0
      %v198 = vadd.f32 0.0, %v197
      %v199 = vpop.f32.mrb[0].mxu0
      %200 = vdwg.mxu0
      %s201 = scalar_lea.vmem [#allocation2], %s21
      %vm202 = vcmask 130048
      %203 = vst.msk [vmem:[%s201] sm:$0xff] %vm202, %v193
      %204 = vst.msk [vmem:[%s201 + $0x8] sm:$0xff] %vm202, %v198
    $region18: #{tpu_custom_call.1} parent=1 // loop_footer
      %s20 = sadd.s32 1, %s16
    $region19: #{tpu_custom_call.1} parent=1 // loop_footer_branch
      %15 = sbr.rel target = $region15
    $region20: #{tpu_custom_call.1} parent=1 // loop_exit
      _
    // Predicated region
    $region21: #{tpu_custom_call.1} parent=1 // pred_check
      _
    $region22: #{tpu_custom_call.1} parent=1 // pred_check_branch
      %206 = sbr.rel (0) target = $region24
    $region23: #{tpu_custom_call.1} parent=1 // pred_region
      %s208 = ssub.s32 1024, 1024
      %209 = vsyncadd [#allocation3], %s208
      %s210 = sshll.u32 [#allocation2], 4
      %s211 = int_to_ptr.vmem [resolvable:$true] %s210
      %216 = dma.vmem_to_hbm [thread:$0]  %s211, 1024, %s3, [#allocation3], 128, 128, 8
    $region24: #{tpu_custom_call.1} parent=1 // pred_fallthru
      _
    // Predicated region
    $region25: #{tpu_custom_call.1} parent=1 // pred_check
      _
    $region26: #{tpu_custom_call.1} parent=1 // pred_check_branch
      %218 = sbr.rel (0) target = $region28
    $region27: #{tpu_custom_call.1} parent=1 // pred_region
      %219 = dma.done [#allocation3], 1024
    $region28: #{tpu_custom_call.1} parent=1 // pred_fallthru
      _
    %220 = vsyncpa [#allocation3], 1

</llo_original>
